<compile_context>
chip_gen: v6e
topology: v6e:2x2x1
jax: 0.10.0
libtpu: 0.0.40
codegen_flags: <defaults>
</compile_context>

<pallas_src>
import functools
import math

import jax
import jax.numpy as jnp
from jax.experimental import pallas as pl
from jax.experimental.pallas import tpu as pltpu


# --------------------------------------------------------------------------
# Kernel 1: tiled linear projection  out = x @ W^T + b   (W in (out,in) layout)
# --------------------------------------------------------------------------
def _linear_kernel(x_ref, w_ref, b_ref, o_ref):
    acc = jax.lax.dot_general(
        x_ref[...], w_ref[...],
        dimension_numbers=(((1,), (1,)), ((), ())),   # contract x dim1 with W dim1
        preferred_element_type=jnp.float32,
    )
    o_ref[...] = (acc + b_ref[...]).astype(o_ref.dtype)


def linear_pallas(x2d, w, b, *, tile_m=512):
    """x2d: (N, D_in), w: (D_out, D_in) torch layout, b: (D_out,)."""
    N, D_in = x2d.shape
    D_out = w.shape[0]
    tm = min(tile_m, N)                      # tm == N (full) or a multiple of 8
    grid_m = pl.cdiv(N, tm)
    return pl.pallas_call(
        _linear_kernel,
        out_shape=jax.ShapeDtypeStruct((N, D_out), x2d.dtype),
        grid_spec=pl.GridSpec(
            grid=(grid_m,),
            in_specs=[
                pl.BlockSpec((tm, D_in), lambda i: (i, 0)),
                pl.BlockSpec((D_out, D_in), lambda i: (0, 0)),   # weight resident
                pl.BlockSpec((1, D_out), lambda i: (0, 0)),      # bias resident
            ],
            out_specs=pl.BlockSpec((tm, D_out), lambda i: (i, 0)),
        ),
        compiler_params=pltpu.CompilerParams(
            dimension_semantics=("parallel",),
        ),
    )(x2d, w, b.reshape(1, D_out))


# --------------------------------------------------------------------------
# Kernel 2: per-batch multi-head attention on the (B, S, H*Dk) layout.
# Heads are split by static column slices inside the kernel; output store is a
# single lane-dense (S, D) write.
# --------------------------------------------------------------------------
def _attn_kernel(m_ref, q_ref, k_ref, v_ref, o_ref, *, n_heads, d_k, scale,
                 zero_pad):
    q = q_ref[0]                       # (S, D)
    k = k_ref[0]                       # (S, D)
    v = v_ref[0]                       # (S, D)
    masked = m_ref[...] == 0           # (S, S) bool, hoisted out of head loop

    if zero_pad:
        row_idx = jax.lax.broadcasted_iota(jnp.int32, masked.shape, 0)
        row0 = row_idx == 0            # hoisted: zero the first query row

    outs = []
    for h in range(n_heads):           # static unroll over heads
        lo, hi = h * d_k, (h + 1) * d_k
        qh = q[:, lo:hi] * scale        # fold 1/sqrt(d_k) into q (S*Dk mul)
        kh = k[:, lo:hi]
        vh = v[:, lo:hi]

        # scores = (q/sqrt(dk)) @ k^T  -- contraction over Dk on the MXU
        scores = jax.lax.dot_general(
            qh, kh, dimension_numbers=(((1,), (1,)), ((), ())),
            preferred_element_type=jnp.float32,
        )                               # (S, S)
        scores = jnp.where(masked, jnp.float32(-1e32), scores)

        # softmax along last axis
        scores = scores - jnp.max(scores, axis=-1, keepdims=True)
        p = jnp.exp(scores)
        inv = pl.reciprocal(jnp.sum(p, axis=-1, keepdims=True), approx=True)
        p = p * inv

        if zero_pad:                    # zero attention weights of query row 0
            p = jnp.where(row0, jnp.float32(0.0), p)

        # dropout: identity in eval mode
        outs.append(jnp.dot(p.astype(vh.dtype), vh,
                            preferred_element_type=jnp.float32))

    o_ref[0] = jnp.concatenate(outs, axis=-1).astype(o_ref.dtype)


def attention_pallas(qp, kp, vp, mask2d, *, n_heads, d_k, zero_pad):
    """qp/kp/vp: (B, S, D) with D = n_heads * d_k.  mask2d: (S, S) int8."""
    B, S, D = qp.shape
    kern = functools.partial(
        _attn_kernel, n_heads=n_heads, d_k=d_k,
        scale=1.0 / math.sqrt(d_k), zero_pad=zero_pad,
    )
    return pl.pallas_call(
        kern,
        out_shape=jax.ShapeDtypeStruct((B, S, D), qp.dtype),
        grid_spec=pl.GridSpec(
            grid=(B,),
            in_specs=[
                pl.BlockSpec((S, S), lambda b: (0, 0)),        # mask, fetched once
                pl.BlockSpec((1, S, D), lambda b: (b, 0, 0)),
                pl.BlockSpec((1, S, D), lambda b: (b, 0, 0)),
                pl.BlockSpec((1, S, D), lambda b: (b, 0, 0)),
            ],
            out_specs=pl.BlockSpec((1, S, D), lambda b: (b, 0, 0)),
        ),
        compiler_params=pltpu.CompilerParams(
            dimension_semantics=("parallel",),    # batch axis -> 2 TCs on v7x
        ),
    )(mask2d, qp, kp, vp)


# --------------------------------------------------------------------------
# Parameter construction (deterministic, mirrors _reset_parameters)
# --------------------------------------------------------------------------
def xavier_uniform(key, shape):
    fan_out, fan_in = shape
    limit = math.sqrt(6.0 / (fan_in + fan_out))
    return jax.random.uniform(key, shape, jnp.float32, -limit, limit)


def init_mha_params(key, d_model, kq_same):
    keys = jax.random.split(key, 4)
    params = {
        "k_w": xavier_uniform(keys[0], (d_model, d_model)),
        "k_b": jnp.zeros((d_model,), jnp.float32),
        "v_w": xavier_uniform(keys[1], (d_model, d_model)),
        "v_b": jnp.zeros((d_model,), jnp.float32),
        "o_w": xavier_uniform(keys[2], (d_model, d_model)),
        "o_b": jnp.zeros((d_model,), jnp.float32),
    }
    if not kq_same:
        params["q_w"] = xavier_uniform(keys[3], (d_model, d_model))
        params["q_b"] = jnp.zeros((d_model,), jnp.float32)
    return params


# --------------------------------------------------------------------------
# Full forward pass.  No activation transposes: projections stay in the
# (bs, seq, d_model) layout and the head split/merge happens inside the
# attention kernel via column slices.
# --------------------------------------------------------------------------
def multi_head_attention_forward(params, q, k, v, mask, *, n_heads, d_k,
                                 kq_same, zero_pad):
    bs, seq, d_model = q.shape

    def project(x, w, b):
        return linear_pallas(x.reshape(bs * seq, d_model), w, b).reshape(
            bs, seq, d_model)

    k_p = project(k, params["k_w"], params["k_b"])
    if kq_same:
        q_p = project(q, params["k_w"], params["k_b"])
    else:
        q_p = project(q, params["q_w"], params["q_b"])
    v_p = project(v, params["v_w"], params["v_b"])

    mask2d = mask.reshape(seq, seq).astype(jnp.int8)
    attn = attention_pallas(q_p, k_p, v_p, mask2d,
                            n_heads=n_heads, d_k=d_k, zero_pad=zero_pad)

    out = linear_pallas(attn.reshape(bs * seq, d_model),
                        params["o_w"], params["o_b"])
    return out.reshape(bs, seq, d_model)


if __name__ == "__main__":
    bs, seq, d_model, n_heads = 2, 8, 32, 4
    d_k = d_model // n_heads
    kq_same = False
    zero_pad = True

    key = jax.random.PRNGKey(0)
    kp, kq, kk, kv = jax.random.split(key, 4)

    params = init_mha_params(kp, d_model, kq_same)

    q = jax.random.normal(kq, (bs, seq, d_model), jnp.float32)
    k = jax.random.normal(kk, (bs, seq, d_model), jnp.float32)
    v = jax.random.normal(kv, (bs, seq, d_model), jnp.float32)

    # causal mask, as used by llmkt: 1 = attend, 0 = masked
    mask = jnp.tril(jnp.ones((seq, seq), jnp.int32)).reshape(1, 1, seq, seq)

    out = multi_head_attention_forward(
        params, q, k, v, mask,
        n_heads=n_heads, d_k=d_k, kq_same=kq_same, zero_pad=zero_pad,
    )
    jax.block_until_ready(out)
    assert out.shape == (bs, seq, d_model)
    assert bool(jnp.all(jnp.isfinite(out)))
    print("KERNEL_OK")
</pallas_src>

<mosaic_0001>
module attributes {stable_mosaic.version = 11 : i64} {
  func.func @_linear_kernel(%arg0: i32, %arg1: memref<16x32xf32, #tpu.memory_space<vmem>>, %arg2: memref<32x32xf32, #tpu.memory_space<vmem>>, %arg3: memref<1x32xf32, #tpu.memory_space<vmem>>, %arg4: memref<16x32xf32, #tpu.memory_space<vmem>>) attributes {dimension_semantics = [#tpu.dimension_semantics<parallel>], iteration_bounds = array<i64: 1>, scalar_prefetch = 0 : i64, scratch_operands = 0 : i64, tpu.core_type = #tpu.core_type<tc>, window_params = [{transform_indices = @transform_0, window_bounds = array<i64: 16, 32>}, {pipeline_mode = #tpu.pipeline_mode<synchronous>, transform_indices = @transform_1, window_bounds = array<i64: 32, 32>}, {pipeline_mode = #tpu.pipeline_mode<synchronous>, transform_indices = @transform_2, window_bounds = array<i64: 1, 32>}, {transform_indices = @transform_3, window_bounds = array<i64: 16, 32>}]} {
    %c0 = arith.constant 0 : index
    %c0_0 = arith.constant 0 : index
    %0 = vector.load %arg1[%c0, %c0_0] : memref<16x32xf32, #tpu.memory_space<vmem>>, vector<16x32xf32>
    %c0_1 = arith.constant 0 : index
    %c0_2 = arith.constant 0 : index
    %1 = vector.load %arg2[%c0_1, %c0_2] : memref<32x32xf32, #tpu.memory_space<vmem>>, vector<32x32xf32>
    %cst = arith.constant dense<0.000000e+00> : vector<16x32xf32>
    %2 = tpu.matmul %0, %1, %cst {dimension_numbers = #tpu.dot_dimension_numbers<[1], [1], [0], [0], [0, 0, 1, 0], [], []>} : vector<16x32xf32>, vector<32x32xf32>, vector<16x32xf32> -> vector<16x32xf32>
    %c0_3 = arith.constant 0 : index
    %c0_4 = arith.constant 0 : index
    %3 = vector.load %arg3[%c0_3, %c0_4] : memref<1x32xf32, #tpu.memory_space<vmem>>, vector<1x32xf32>
    %4 = vector.broadcast %3 : vector<1x32xf32> to vector<16x32xf32>
    %5 = arith.addf %2, %4 : vector<16x32xf32>
    %c0_5 = arith.constant 0 : index
    %c0_6 = arith.constant 0 : index
    %6 = vector.load %arg4[%c0_5, %c0_6] : memref<16x32xf32, #tpu.memory_space<vmem>>, vector<16x32xf32>
    tpu.vector_store %arg4[%c0_5, %c0_6], %5 {strides = array<i32>} : memref<16x32xf32, #tpu.memory_space<vmem>>, vector<16x32xf32>,
    return
  }
  func.func @transform_0(%arg0: i32) -> (i32, i32) {
    %c0_i32 = arith.constant 0 : i32
    %c0_i32_0 = arith.constant 0 : i32
    return %arg0, %c0_i32 : i32, i32
  }
  func.func @transform_1(%arg0: i32) -> (i32, i32) {
    %c0_i32 = arith.constant 0 : i32
    %c0_i32_0 = arith.constant 0 : i32
    %c0_i32_1 = arith.constant 0 : i32
    return %c0_i32, %c0_i32_0 : i32, i32
  }
  func.func @transform_2(%arg0: i32) -> (i32, i32) {
    %c0_i32 = arith.constant 0 : i32
    %c0_i32_0 = arith.constant 0 : i32
    %c0_i32_1 = arith.constant 0 : i32
    return %c0_i32, %c0_i32_0 : i32, i32
  }
  func.func @transform_3(%arg0: i32) -> (i32, i32) {
    %c0_i32 = arith.constant 0 : i32
    %c0_i32_0 = arith.constant 0 : i32
    return %arg0, %c0_i32 : i32, i32
  }
}

</mosaic_0001>

<llo_original>
// kernel: tpu_custom_call.1
$region0: #{tpu_custom_call.1}
  #allocation0 [shape = 'u32[]', space=smem, size = 0x4, offset = 0x4, fixed_abs, tag = 'smem constant byte address 0x4 - core index']
  #allocation1 [shape = 'u32[144,128]{1,0:T(1,128)}', space=vmem, size = 0x12000, scoped, tag = 'internal scratch']
  %s0 = inlined_call_operand.hbm [shape: f32[16,32], index: 0, kind: input, shape index: {}]
  %s1 = inlined_call_operand.hbm [shape: f32[32,32], index: 1, kind: input, shape index: {}]
  %s2 = inlined_call_operand.vmem [shape: f32[1,32], index: 2, kind: input, shape index: {}]
  %s3 = inlined_call_operand.hbm [shape: f32[16,32], index: 3, kind: output, shape index: {}]
  %s4 = sld [smem:[#allocation0]]
  $region30: #{tpu_custom_call.1} parent=0
    _
  %s6 = ssub.s32 1, %s4
  %s7 = scalar_select 0, %s6, %s4
  $region1: #{tpu_custom_call.1} parent=0
    #allocation2 [shape = 'u8[8192]{0}', space=vmem, size = 0x2000, scoped, tag = 'input window, operand 0, single buffered']
    #allocation3 [shape = 's32[1]{0}', space=sflag, size = 0x4, scoped, tag = 'scoped memory for tpu_custom_call.1']
    #allocation4 [shape = 's32[1]{0}', space=sflag, size = 0x4, scoped, tag = 'scoped memory for tpu_custom_call.1']
    #allocation5 [shape = 'u8[16384]{0}', space=vmem, size = 0x4000, scoped, tag = 'input window, operand 1, single buffered']
    #allocation6 [shape = 's32[1]{0}', space=sflag, size = 0x4, scoped, tag = 'scoped memory for tpu_custom_call.1']
    #allocation7 [shape = 'u8[8192]{0}', space=vmem, size = 0x2000, scoped, tag = 'output window, operand 0, single buffered']
    %8 = vsyncpa [#allocation3], 0
    %9 = vsyncpa [#allocation6], 0
    %10 = vsyncpa [#allocation4], 0
    // Predicated region
    $region2: #{tpu_custom_call.1} parent=1 // pred_check
      _
    $region3: #{tpu_custom_call.1} parent=1 // pred_check_branch
      %12 = sbr.rel (0) target = $region5
    $region4: #{tpu_custom_call.1} parent=1 // pred_region
      %s14 = ssub.s32 256, 256
      %15 = vsyncadd [#allocation3], %s14
      %s16 = sshll.u32 [#allocation2], 4
      %s17 = int_to_ptr.vmem [resolvable:$true] %s16
      %22 = dma.hbm_to_vmem [thread:$0]  %s0, 256, %s17, [#allocation3], 128, 128, 8
    $region5: #{tpu_custom_call.1} parent=1 // pred_fallthru
      _
    // Predicated region
    $region6: #{tpu_custom_call.1} parent=1 // pred_check
      _
    $region7: #{tpu_custom_call.1} parent=1 // pred_check_branch
      %24 = sbr.rel (0) target = $region9
    $region8: #{tpu_custom_call.1} parent=1 // pred_region
      %s26 = ssub.s32 512, 512
      %27 = vsyncadd [#allocation6], %s26
      %s28 = sshll.u32 [#allocation5], 4
      %s29 = int_to_ptr.vmem [resolvable:$true] %s28
      %34 = dma.hbm_to_vmem [thread:$0]  %s1, 512, %s29, [#allocation6], 128, 128, 8
    $region9: #{tpu_custom_call.1} parent=1 // pred_fallthru
      _
    // Predicated region
    $region10: #{tpu_custom_call.1} parent=1 // pred_check
      _
    $region11: #{tpu_custom_call.1} parent=1 // pred_check_branch
      %36 = sbr.rel (0) target = $region13
    $region12: #{tpu_custom_call.1} parent=1 // pred_region
      _
    $region13: #{tpu_custom_call.1} parent=1 // pred_fallthru
      _
    // Predicated region
    $region14: #{tpu_custom_call.1} parent=1 // pred_check
      _
    $region15: #{tpu_custom_call.1} parent=1 // pred_check_branch
      %38 = sbr.rel (0) target = $region17
    $region16: #{tpu_custom_call.1} parent=1 // pred_region
      %39 = dma.done [#allocation3], 256
    $region17: #{tpu_custom_call.1} parent=1 // pred_fallthru
      _
    // Predicated region
    $region18: #{tpu_custom_call.1} parent=1 // pred_check
      _
    $region19: #{tpu_custom_call.1} parent=1 // pred_check_branch
      %41 = sbr.rel (0) target = $region21
    $region20: #{tpu_custom_call.1} parent=1 // pred_region
      %42 = dma.done [#allocation6], 512
    $region21: #{tpu_custom_call.1} parent=1 // pred_fallthru
      _
    %v43 = vld [vmem:[#allocation2] sm:$0xff]
    %v44 = vld [vmem:[#allocation2 + $0x8] sm:$0xff]
    %v45 = vld [vmem:[#allocation5] sm:$0xff]
    %v46 = vld [vmem:[#allocation5 + $0x8] sm:$0xff]
    %v47 = vld [vmem:[#allocation5 + $0x10] sm:$0xff]
    %v48 = vld [vmem:[#allocation5 + $0x18] sm:$0xff]
    %v49 = vld [vmem:[%s2] sm:$0x1]
    %v51 = vlaneseq
    %v52 = vshrl.u32 %v51, 7
    %v53 = vsub.s32 0, %v52
    %v54 = vrot.slane %v49, %v53
    %vm56 = vcmask 261120
    %v58 = vsel %vm56, %v43, 0
    %v61 = vsel %vm56, %v44, 0
    %v64 = vsel %vm56, %v45, 0
    %v67 = vsel %vm56, %v46, 0
    %v70 = vsel %vm56, %v47, 0
    %v73 = vsel %vm56, %v48, 0
    %75 = vmatprep.subr.mxu0 0.0
    %76 = vmatpush1.xpose.msra.mxu0 0.0
    %77 = vmatprep.subr.mxu0 0.0
    %78 = vmatpush1.xpose.msra.mxu0 0.0
    %79 = vmatprep.subr.mxu0 0.0
    %80 = vmatpush1.xpose.msra.mxu0 0.0
    %81 = vmatprep.subr.mxu0 0.0
    %82 = vmatpush1.xpose.msra.mxu0 0.0
    %83 = vmatprep.subr.mxu0 0.0
    %84 = vmatpush1.xpose.msra.mxu0 0.0
    %85 = vmatprep.subr.mxu0 0.0
    %86 = vmatpush1.xpose.msra.mxu0 0.0
    %87 = vmatprep.subr.mxu0 0.0
    %88 = vmatpush1.xpose.msra.mxu0 0.0
    %89 = vmatprep.subr.mxu0 0.0
    %90 = vmatpush1.xpose.msra.mxu0 0.0
    %91 = vmatprep.subr.mxu0 0.0
    %92 = vmatpush1.xpose.msra.mxu0 0.0
    %93 = vmatprep.subr.mxu0 0.0
    %94 = vmatpush1.xpose.msra.mxu0 0.0
    %95 = vmatprep.subr.mxu0 0.0
    %96 = vmatpush1.xpose.msra.mxu0 0.0
    %97 = vmatprep.subr.mxu0 0.0
    %98 = vmatpush1.xpose.msra.mxu0 0.0
    %99 = vmatprep.subr.mxu0 0.0
    %100 = vmatpush1.xpose.msra.mxu0 %v73
    %101 = vmatprep.subr.mxu0 0.0
    %102 = vmatpush1.xpose.msra.mxu0 %v70
    %103 = vmatprep.subr.mxu0 0.0
    %104 = vmatpush1.xpose.msra.mxu0 %v67
    %105 = vmatprep.subr.mxu0 0.0
    %106 = vmatpush1.xpose.msra.mxu0 %v64
    %107 = vmatprep.subr.mxu0 0.0
    %108 = vmatpush2.xpose.msra.mxu0 0.0
    %109 = vmatprep.subr.mxu0 0.0
    %110 = vmatpush2.xpose.msra.mxu0 0.0
    %111 = vmatprep.subr.mxu0 0.0
    %112 = vmatpush2.xpose.msra.mxu0 0.0
    %113 = vmatprep.subr.mxu0 0.0
    %114 = vmatpush2.xpose.msra.mxu0 0.0
    %115 = vmatprep.subr.mxu0 0.0
    %116 = vmatpush2.xpose.msra.mxu0 0.0
    %117 = vmatprep.subr.mxu0 0.0
    %118 = vmatpush2.xpose.msra.mxu0 0.0
    %119 = vmatprep.subr.mxu0 0.0
    %120 = vmatpush2.xpose.msra.mxu0 0.0
    %121 = vmatprep.subr.mxu0 0.0
    %122 = vmatpush2.xpose.msra.mxu0 0.0
    %123 = vmatprep.subr.mxu0 0.0
    %124 = vmatpush2.xpose.msra.mxu0 0.0
    %125 = vmatprep.subr.mxu0 0.0
    %126 = vmatpush2.xpose.msra.mxu0 0.0
    %127 = vmatprep.subr.mxu0 0.0
    %128 = vmatpush2.xpose.msra.mxu0 0.0
    %129 = vmatprep.subr.mxu0 0.0
    %130 = vmatpush2.xpose.msra.mxu0 0.0
    %131 = vmatprep.subr.mxu0 0.0
    %132 = vmatpush2.xpose.msra.mxu0 0.0
    %133 = vmatprep.subr.mxu0 0.0
    %134 = vmatpush2.xpose.msra.mxu0 0.0
    %135 = vmatprep.subr.mxu0 0.0
    %136 = vmatpush2.xpose.msra.mxu0 0.0
    %137 = vmatprep.subr.mxu0 0.0
    %138 = vmatpush2.xpose.msra.mxu0 0.0
    %139 = vmatprep.mubr.f32.mxu0 0.0
    %140 = vmatmul.mubr.f32.gmra.mxu0 %v58
    %v141 = vpop.f32.mrf.mxu0
    %v142 = vadd.f32 %v54, %v141
    %v143 = vpop.f32.mrf.mxu0
    %144 = vmatprep.mubr.f32.mxu0 0.0
    %145 = vmatmul.mubr.f32.gmra.mxu0 %v61
    %v146 = vpop.f32.mrf.mxu0
    %v147 = vadd.f32 %v54, %v146
    %v148 = vpop.f32.mrf.mxu0
    %149 = vdwg.mxu0
    %150 = vst.msk [vmem:[#allocation7] sm:$0xff] %vm56, %v142
    %151 = vst.msk [vmem:[#allocation7 + $0x8] sm:$0xff] %vm56, %v147
    // Predicated region
    $region22: #{tpu_custom_call.1} parent=1 // pred_check
      _
    $region23: #{tpu_custom_call.1} parent=1 // pred_check_branch
      %153 = sbr.rel (0) target = $region25
    $region24: #{tpu_custom_call.1} parent=1 // pred_region
      %s155 = ssub.s32 256, 256
      %156 = vsyncadd [#allocation4], %s155
      %s157 = sshll.u32 [#allocation7], 4
      %s158 = int_to_ptr.vmem [resolvable:$true] %s157
      %163 = dma.vmem_to_hbm [thread:$0]  %s158, 256, %s3, [#allocation4], 128, 128, 8
    $region25: #{tpu_custom_call.1} parent=1 // pred_fallthru
      _
    // Predicated region
    $region26: #{tpu_custom_call.1} parent=1 // pred_check
      _
    $region27: #{tpu_custom_call.1} parent=1 // pred_check_branch
      %165 = sbr.rel (0) target = $region29
    $region28: #{tpu_custom_call.1} parent=1 // pred_region
      %166 = dma.done [#allocation4], 256
    $region29: #{tpu_custom_call.1} parent=1 // pred_fallthru
      _
    %167 = vsyncpa [#allocation3], 1
    %168 = vsyncpa [#allocation6], 1
    %169 = vsyncpa [#allocation4], 1

</llo_original>
